<compile_context>
chip_gen: v7x
topology: tpu7x:2x2x1
jax: 0.10.0
libtpu: 0.0.40
codegen_flags: <defaults>
</compile_context>

<pallas_src>
import jax
import jax.numpy as jnp
from jax.experimental import pallas as pl
from jax.experimental.pallas import tpu as pltpu


def _round_up(x, m):
    return (x + m - 1) // m * m


def _circular_mask_kernel(dist_ref, thr_ref, img_ref, out_ref):
    # dist_ref: (1, TN)  int32   -- resident distance-from-center map tile
    # thr_ref:  (TB, 1)  int32   -- per-row radius^2 (INT32_MAX => passthrough)
    # img_ref / out_ref: (TB, TN) image tiles
    keep = dist_ref[...] <= thr_ref[...]          # (1,TN) vs (TB,1) -> (TB,TN)
    out_ref[...] = jnp.where(keep, img_ref[...], jnp.zeros((), out_ref.dtype))


def circular_filter_augmentation(images, key, radius_range, p=0.5):
    """JAX/Pallas equivalent of CircularFilterAugmentation.forward."""
    B, H, W = images.shape
    k1, k2 = jax.random.split(key)

    # apply_mask = rand(B) < p
    apply_mask = jax.random.uniform(k1, (B,)) < p

    # random_radii = (rand * (max - min) + min) * min(H, W); .int() // 2
    random_radii = (
        jax.random.uniform(k2, (B,)) * (radius_range[1] - radius_range[0])
        + radius_range[0]
    ) * min(H, W)
    random_radii = random_radii.astype(jnp.int32) // 2
    rsq = random_radii * random_radii

    # Fold the apply-probability into the threshold:
    #   apply == False -> threshold = INT32_MAX -> dist <= thr everywhere
    #   -> output == input (exact passthrough, no multiply needed).
    thr = jnp.where(apply_mask, rsq, jnp.int32(jnp.iinfo(jnp.int32).max))

    # Distance-from-center map, computed once on the host side of the kernel.
    y = jnp.arange(H, dtype=jnp.int32)[:, None]
    x = jnp.arange(W, dtype=jnp.int32)[None, :]
    dist = (x - W // 2) ** 2 + (y - H // 2) ** 2          # (H, W) int32

    # ---- tiling / padding -------------------------------------------------
    N = H * W
    TB = 8                                  # batch rows per grid step
    TN_MAX = 16384                          # 8 * 16384 * 4B = 512 KiB f32 tile
    TN = min(_round_up(N, 128), TN_MAX)     # lane-dense tile (multiple of 128)
    B_pad = _round_up(B, TB)
    N_pad = _round_up(N, TN)

    img_flat = jnp.pad(images.reshape(B, N), ((0, B_pad - B), (0, N_pad - N)))
    dist_flat = jnp.pad(dist.reshape(1, N), ((0, 0), (0, N_pad - N)))
    thr_col = jnp.pad(thr.reshape(B, 1), ((0, B_pad - B), (0, 0)))

    # Grid: (lane tiles, batch tiles). Batch axis is innermost, so the dist
    # tile's block index (0, j) is constant across it and stays resident.
    grid = (N_pad // TN, B_pad // TB)

    out = pl.pallas_call(
        _circular_mask_kernel,
        out_shape=jax.ShapeDtypeStruct((B_pad, N_pad), images.dtype),
        grid_spec=pl.GridSpec(
            grid=grid,
            in_specs=[
                pl.BlockSpec((1, TN), lambda j, i: (0, j)),    # dist (resident)
                pl.BlockSpec((TB, 1), lambda j, i: (i, 0)),    # thresholds
                pl.BlockSpec((TB, TN), lambda j, i: (i, j)),   # images
            ],
            out_specs=pl.BlockSpec((TB, TN), lambda j, i: (i, j)),
        ),
        compiler_params=pltpu.CompilerParams(
            dimension_semantics=("parallel", "parallel"),
            vmem_limit_bytes=32 * 1024 * 1024,
        ),
    )(dist_flat, thr_col, img_flat)

    return out[:B, :N].reshape(B, H, W)


def _reference(images, apply_mask, rsq):
    B, H, W = images.shape
    y, x = jnp.meshgrid(jnp.arange(H), jnp.arange(W), indexing="ij")
    cy, cx = H // 2, W // 2
    dist = (x - cx) ** 2 + (y - cy) ** 2
    mask = (dist[None, :, :] <= rsq[:, None, None]).astype(images.dtype)
    return jnp.where(apply_mask[:, None, None], images * mask, images)


if __name__ == "__main__":
    key = jax.random.PRNGKey(0)
    k_img, k_aug = jax.random.split(key)

    B, H, W = 2, 16, 16
    radius_range = (0.3, 0.8)
    p = 0.5

    images = jax.random.normal(k_img, (B, H, W), dtype=jnp.float32)

    out = circular_filter_augmentation(images, k_aug, radius_range, p=p)
    out = jax.block_until_ready(out)

    # cross-check against a pure-JAX reference using the same random draws
    k1, k2 = jax.random.split(k_aug)
    apply_mask = jax.random.uniform(k1, (B,)) < p
    radii = (
        jax.random.uniform(k2, (B,)) * (radius_range[1] - radius_range[0])
        + radius_range[0]
    ) * min(H, W)
    radii = radii.astype(jnp.int32) // 2
    rsq = radii * radii
    ref = _reference(images, apply_mask, rsq)

    assert out.shape == (B, H, W)
    assert jnp.allclose(out, ref), "mismatch vs reference"

    print("KERNEL_OK")
</pallas_src>

<mosaic_0001>
module attributes {stable_mosaic.version = 11 : i64} {
  func.func @_circular_mask_kernel(%arg0: i32, %arg1: i32, %arg2: memref<1x256xi32, #tpu.memory_space<vmem>>, %arg3: memref<8x1xi32, #tpu.memory_space<vmem>>, %arg4: memref<8x256xf32, #tpu.memory_space<vmem>>, %arg5: memref<8x256xf32, #tpu.memory_space<vmem>>) attributes {dimension_semantics = [#tpu.dimension_semantics<parallel>, #tpu.dimension_semantics<parallel>], iteration_bounds = array<i64: 1, 1>, scalar_prefetch = 0 : i64, scratch_operands = 0 : i64, tpu.core_type = #tpu.core_type<tc>, window_params = [{transform_indices = @transform_0, window_bounds = array<i64: 1, 256>}, {transform_indices = @transform_1, window_bounds = array<i64: 8, 1>}, {transform_indices = @transform_2, window_bounds = array<i64: 8, 256>}, {transform_indices = @transform_3, window_bounds = array<i64: 8, 256>}]} {
    %c0 = arith.constant 0 : index
    %c0_0 = arith.constant 0 : index
    %0 = vector.load %arg2[%c0, %c0_0] : memref<1x256xi32, #tpu.memory_space<vmem>>, vector<1x256xi32>
    %c0_1 = arith.constant 0 : index
    %c0_2 = arith.constant 0 : index
    %1 = vector.load %arg3[%c0_1, %c0_2] : memref<8x1xi32, #tpu.memory_space<vmem>>, vector<8x1xi32>
    %2 = vector.broadcast %0 : vector<1x256xi32> to vector<8x256xi32>
    %3 = vector.broadcast %1 : vector<8x1xi32> to vector<8x256xi32>
    %4 = arith.cmpi sle, %2, %3 : vector<8x256xi32>
    %c0_3 = arith.constant 0 : index
    %c0_4 = arith.constant 0 : index
    %5 = vector.load %arg4[%c0_3, %c0_4] : memref<8x256xf32, #tpu.memory_space<vmem>>, vector<8x256xf32>
    %cst = arith.constant 0.000000e+00 : f32
    %6 = vector.broadcast %cst : f32 to vector<8x256xf32>
    %7 = arith.select %4, %5, %6 : vector<8x256xi1>, vector<8x256xf32>
    %c0_5 = arith.constant 0 : index
    %c0_6 = arith.constant 0 : index
    %8 = vector.load %arg5[%c0_5, %c0_6] : memref<8x256xf32, #tpu.memory_space<vmem>>, vector<8x256xf32>
    tpu.vector_store %arg5[%c0_5, %c0_6], %7 {strides = array<i32>} : memref<8x256xf32, #tpu.memory_space<vmem>>, vector<8x256xf32>,
    return
  }
  func.func @transform_0(%arg0: i32, %arg1: i32) -> (i32, i32) {
    %c0_i32 = arith.constant 0 : i32
    %c0_i32_0 = arith.constant 0 : i32
    return %c0_i32, %arg0 : i32, i32
  }
  func.func @transform_1(%arg0: i32, %arg1: i32) -> (i32, i32) {
    %c0_i32 = arith.constant 0 : i32
    %c0_i32_0 = arith.constant 0 : i32
    return %arg1, %c0_i32 : i32, i32
  }
  func.func @transform_2(%arg0: i32, %arg1: i32) -> (i32, i32) {
    %c0_i32 = arith.constant 0 : i32
    return %arg1, %arg0 : i32, i32
  }
  func.func @transform_3(%arg0: i32, %arg1: i32) -> (i32, i32) {
    %c0_i32 = arith.constant 0 : i32
    return %arg1, %arg0 : i32, i32
  }
}

</mosaic_0001>

<llo_original>
// kernel: tpu_custom_call.1
$region0: #{tpu_custom_call.1}
  #allocation0 [shape = 'u32[]', space=smem, size = 0x4, offset = 0x4, fixed_abs, tag = 'smem constant byte address 0x4 - core index']
  #allocation1 [shape = 'u32[144,128]{1,0:T(1,128)}', space=vmem, size = 0x12000, scoped, tag = 'internal scratch']
  %s0 = inlined_call_operand.hbm [shape: s32[1,256], index: 0, kind: input, shape index: {}]
  %s1 = inlined_call_operand.vmem [shape: s32[8,1], index: 1, kind: input, shape index: {}]
  %s2 = inlined_call_operand.vmem [shape: f32[8,256], index: 2, kind: input, shape index: {}]
  %s3 = inlined_call_operand.hbm [shape: f32[8,256], index: 3, kind: output, shape index: {}]
  %s4 = sld [smem:[#allocation0]]
  $region26: #{tpu_custom_call.1} parent=0
    _
  %s6 = ssub.s32 1, %s4
  %s7 = scalar_select 0, %s6, %s4
  $region1: #{tpu_custom_call.1} parent=0
    #allocation2 [shape = 'u8[1024]{0}', space=vmem, size = 0x400, scoped, tag = 'input window, operand 0, single buffered']
    #allocation3 [shape = 's32[1]{0}', space=sflag, size = 0x4, scoped, tag = 'scoped memory for tpu_custom_call.1']
    #allocation4 [shape = 's32[1]{0}', space=sflag, size = 0x4, scoped, tag = 'scoped memory for tpu_custom_call.1']
    #allocation5 [shape = 'u8[8192]{0}', space=vmem, size = 0x2000, scoped, tag = 'output window, operand 0, single buffered']
    %8 = vsyncpa [#allocation3], 0
    %9 = vsyncpa [#allocation4], 0
    // Predicated region
    $region2: #{tpu_custom_call.1} parent=1 // pred_check
      _
    $region3: #{tpu_custom_call.1} parent=1 // pred_check_branch
      %11 = sbr.rel (0) target = $region5
    $region4: #{tpu_custom_call.1} parent=1 // pred_region
      %s13 = ssub.s32 32, 32
      %14 = vsyncadd [#allocation3], %s13
      %s16 = sshll.u32 [#allocation2], 4
      %s17 = int_to_ptr.vmem [resolvable:$true] %s16
      %19 = dma.hbm_to_vmem [thread:$0]  %s0, 32, %s17, [#allocation3]
    $region5: #{tpu_custom_call.1} parent=1 // pred_fallthru
      _
    // Predicated region
    $region6: #{tpu_custom_call.1} parent=1 // pred_check
      _
    $region7: #{tpu_custom_call.1} parent=1 // pred_check_branch
      %21 = sbr.rel (0) target = $region9
    $region8: #{tpu_custom_call.1} parent=1 // pred_region
      _
    $region9: #{tpu_custom_call.1} parent=1 // pred_fallthru
      _
    // Predicated region
    $region10: #{tpu_custom_call.1} parent=1 // pred_check
      _
    $region11: #{tpu_custom_call.1} parent=1 // pred_check_branch
      %23 = sbr.rel (0) target = $region13
    $region12: #{tpu_custom_call.1} parent=1 // pred_region
      _
    $region13: #{tpu_custom_call.1} parent=1 // pred_fallthru
      _
    // Predicated region
    $region14: #{tpu_custom_call.1} parent=1 // pred_check
      _
    $region15: #{tpu_custom_call.1} parent=1 // pred_check_branch
      %25 = sbr.rel (0) target = $region17
    $region16: #{tpu_custom_call.1} parent=1 // pred_region
      %26 = dma.done [#allocation3], 32
    $region17: #{tpu_custom_call.1} parent=1 // pred_fallthru
      _
    %v27 = vld [vmem:[#allocation2] sm:$0x3]
    %v28 = vld [vmem:[%s1] sm:$0xff]
    %v29 = vlaneseq
    %v30 = vshrl.u32 %v29, 7
    %v31 = vsub.s32 0, %v30
    %v32 = vrot.slane %v27, %v31
    %v33 = vlaneseq
    %v34 = vshrl.u32 %v33, 7
    %v35 = vsub.s32 1, %v34
    %v36 = vrot.slane %v27, %v35
    %37 = vset.pattern.permute.xlu0 0
    %38 = vperm.xlu0 %37, %v28
    %v39 = vpop.permute.xlu0 %38
    %vm40 = vcmp.le.s32.totalorder %v32, %v39
    %vm41 = vcmp.le.s32.totalorder %v36, %v39
    %v42 = vld [vmem:[%s2] sm:$0xff]
    %v43 = vld [vmem:[%s2 + $0x8] sm:$0xff]
    %v44 = vsel %vm40, %v42, 0.0
    %v45 = vsel %vm41, %v43, 0.0
    %46 = vst [vmem:[#allocation5] sm:$0xff] %v44
    %47 = vst [vmem:[#allocation5 + $0x8] sm:$0xff] %v45
    // Predicated region
    $region18: #{tpu_custom_call.1} parent=1 // pred_check
      _
    $region19: #{tpu_custom_call.1} parent=1 // pred_check_branch
      %49 = sbr.rel (0) target = $region21
    $region20: #{tpu_custom_call.1} parent=1 // pred_region
      %s51 = ssub.s32 256, 256
      %52 = vsyncadd [#allocation4], %s51
      %s54 = sshll.u32 [#allocation5], 4
      %s55 = int_to_ptr.vmem [resolvable:$true] %s54
      %57 = dma.vmem_to_hbm [thread:$0]  %s55, 256, %s3, [#allocation4]
    $region21: #{tpu_custom_call.1} parent=1 // pred_fallthru
      _
    // Predicated region
    $region22: #{tpu_custom_call.1} parent=1 // pred_check
      _
    $region23: #{tpu_custom_call.1} parent=1 // pred_check_branch
      %59 = sbr.rel (0) target = $region25
    $region24: #{tpu_custom_call.1} parent=1 // pred_region
      %60 = dma.done [#allocation4], 256
    $region25: #{tpu_custom_call.1} parent=1 // pred_fallthru
      _
    %61 = vsyncpa [#allocation3], 1
    %62 = vsyncpa [#allocation4], 1

</llo_original>
